<compile_context>
chip_gen: v5e
topology: v5e:2x2
jax: 0.10.0
libtpu: 0.0.40
codegen_flags: <defaults>
</compile_context>

<pallas_src>
import functools

import jax
import jax.numpy as jnp
from jax.experimental import pallas as pl
from jax.experimental.pallas import tpu as pltpu


def _round_up(a, b):
    return (a + b - 1) // b * b


def _mlp_kernel(x_ref, w0_ref, b0_ref, w1_ref, b1_ref, w2_ref, b2_ref, o_ref,
                *, compute_dtype):
    # Three MXU matmuls + VPU bias/relu, fused per row-tile.
    # Matmul operands in compute_dtype (bf16 by default), f32 accumulation,
    # bias-add / relu / final cast in f32.
    x = x_ref[...].astype(compute_dtype)
    h = jnp.dot(x, w0_ref[...], preferred_element_type=jnp.float32) + b0_ref[...]
    h = jnp.maximum(h, 0.0)
    h = jnp.dot(h.astype(compute_dtype), w1_ref[...],
                preferred_element_type=jnp.float32) + b1_ref[...]
    h = jnp.maximum(h, 0.0)
    y = jnp.dot(h.astype(compute_dtype), w2_ref[...],
                preferred_element_type=jnp.float32) + b2_ref[...]
    o_ref[...] = y.astype(o_ref.dtype)


def _pick_tile_rows(n_rows):
    """Tuned row tile: big enough to amortize per-grid-step overhead, multiple
    of 16 (bf16 sublane packing), capped so the grid keeps >=2 steps when the
    problem is large enough (megacore sharding on v7x)."""
    requested = 512
    t = min(requested, _round_up(n_rows, 16))
    if n_rows >= 64:
        t = min(t, _round_up(pl.cdiv(n_rows, 2), 16))
    return max(t, 16)


@functools.partial(jax.jit, static_argnames=("compute_dtype", "tile_rows"))
def particle_predictor_forward(x, params, *, compute_dtype=jnp.bfloat16,
                               tile_rows=None):
    """x: [..., input_size]  ->  [..., output_size]"""
    w0, b0, w1, b1, w2, b2 = params
    in_size = x.shape[-1]
    out_size = w2.shape[-1]
    lead_shape = x.shape[:-1]

    x2d = x.reshape(-1, in_size)
    n_rows = x2d.shape[0]

    if tile_rows is None:
        tile_rows = _pick_tile_rows(n_rows)

    # Lane-dense output: pad final-layer columns to a multiple of 128 so the
    # output block writes full 128-lane vregs (unmasked vst); padded weight /
    # bias columns are zero, so the padded outputs are exactly zero.
    out_pad = _round_up(out_size, 128)
    if out_pad != out_size:
        w2 = jnp.pad(w2, ((0, 0), (0, out_pad - out_size)))
        b2 = jnp.pad(b2, ((0, out_pad - out_size),))

    # Weights in matmul compute dtype (halves resident-weight DMA bytes for
    # bf16); biases kept f32 as (1, F) so they broadcast over the row tile.
    w0c = w0.astype(compute_dtype)
    w1c = w1.astype(compute_dtype)
    w2c = w2.astype(compute_dtype)
    b0r = b0.astype(jnp.float32).reshape(1, -1)
    b1r = b1.astype(jnp.float32).reshape(1, -1)
    b2r = b2.astype(jnp.float32).reshape(1, -1)

    # No wrapper-side jnp.pad of x: Pallas masks the ragged last row block.
    grid = (pl.cdiv(n_rows, tile_rows),)

    out = pl.pallas_call(
        functools.partial(_mlp_kernel, compute_dtype=compute_dtype),
        out_shape=jax.ShapeDtypeStruct((n_rows, out_pad), x.dtype),
        grid_spec=pltpu.PrefetchScalarGridSpec(
            num_scalar_prefetch=0,
            grid=grid,
            in_specs=[
                pl.BlockSpec((tile_rows, in_size), lambda i: (i, 0)),  # x tile
                # Weights/biases have constant index maps -> stay resident in
                # VMEM across the whole grid.
                pl.BlockSpec(w0c.shape, lambda i: (0, 0)),
                pl.BlockSpec(b0r.shape, lambda i: (0, 0)),
                pl.BlockSpec(w1c.shape, lambda i: (0, 0)),
                pl.BlockSpec(b1r.shape, lambda i: (0, 0)),
                pl.BlockSpec(w2c.shape, lambda i: (0, 0)),
                pl.BlockSpec(b2r.shape, lambda i: (0, 0)),
            ],
            out_specs=pl.BlockSpec((tile_rows, out_pad), lambda i: (i, 0)),
        ),
        compiler_params=pltpu.CompilerParams(
            dimension_semantics=("parallel",)),
    )(x2d, w0c, b0r, w1c, b1r, w2c, b2r)

    out = out[:, :out_size]
    return out.reshape(lead_shape + (out_size,))


def init_params(key, input_size, hidden_size, output_size, dtype=jnp.float32):
    """Deterministic init mirroring nn.Linear's U(-1/sqrt(fan_in), 1/sqrt(fan_in))."""
    ks = jax.random.split(key, 6)

    def linear(kw, kb, fan_in, fan_out):
        bound = 1.0 / jnp.sqrt(fan_in)
        w = jax.random.uniform(kw, (fan_in, fan_out), dtype, -bound, bound)
        b = jax.random.uniform(kb, (fan_out,), dtype, -bound, bound)
        return w, b

    w0, b0 = linear(ks[0], ks[1], input_size, hidden_size)
    w1, b1 = linear(ks[2], ks[3], hidden_size, hidden_size)
    w2, b2 = linear(ks[4], ks[5], hidden_size, output_size)
    return (w0, b0, w1, b1, w2, b2)


def reference_forward(x, params):
    w0, b0, w1, b1, w2, b2 = params
    s = x.shape
    h = x.reshape(-1, s[-1])
    h = jnp.maximum(h @ w0 + b0, 0.0)
    h = jnp.maximum(h @ w1 + b1, 0.0)
    y = h @ w2 + b2
    return y.reshape(s[:-1] + (-1,))


if __name__ == "__main__":
    input_size, hidden_size, output_size = 16, 32, 8
    batch, seq = 2, 8  # forward flattens all leading dims -> 16 rows

    key = jax.random.PRNGKey(0)
    kx, kp = jax.random.split(key)
    x = jax.random.normal(kx, (batch, seq, input_size), dtype=jnp.float32)
    params = init_params(kp, input_size, hidden_size, output_size)

    ref = reference_forward(x, params)

    # Strict check of kernel structure / masking / output padding (f32 path).
    out_f32 = jax.block_until_ready(
        particle_predictor_forward(x, params, compute_dtype=jnp.float32))
    assert out_f32.shape == (batch, seq, output_size), out_f32.shape
    assert jnp.allclose(out_f32, ref, atol=1e-5, rtol=1e-5), "f32 mismatch vs reference"

    # Default bf16-matmul-operand path (MXU-friendly on v6e/v7x); f32 accum,
    # so tolerance only needs to cover bf16 operand rounding.
    out_bf16 = jax.block_until_ready(particle_predictor_forward(x, params))
    assert out_bf16.shape == (batch, seq, output_size), out_bf16.shape
    assert jnp.allclose(out_bf16, ref, atol=5e-2, rtol=5e-2), "bf16 mismatch vs reference"

    print("KERNEL_OK")
</pallas_src>

<mosaic_0001>
module attributes {stable_mosaic.version = 11 : i64} {
  func.func @_mlp_kernel(%arg0: i32, %arg1: memref<16x16xf32, #tpu.memory_space<vmem>>, %arg2: memref<16x32xf32, #tpu.memory_space<vmem>>, %arg3: memref<1x32xf32, #tpu.memory_space<vmem>>, %arg4: memref<32x32xf32, #tpu.memory_space<vmem>>, %arg5: memref<1x32xf32, #tpu.memory_space<vmem>>, %arg6: memref<32x128xf32, #tpu.memory_space<vmem>>, %arg7: memref<1x128xf32, #tpu.memory_space<vmem>>, %arg8: memref<16x128xf32, #tpu.memory_space<vmem>>) attributes {dimension_semantics = [#tpu.dimension_semantics<parallel>], iteration_bounds = array<i64: 1>, scalar_prefetch = 0 : i64, scratch_operands = 0 : i64, tpu.core_type = #tpu.core_type<tc>, window_params = [{transform_indices = @transform_0, window_bounds = array<i64: 16, 16>}, {pipeline_mode = #tpu.pipeline_mode<synchronous>, transform_indices = @transform_1, window_bounds = array<i64: 16, 32>}, {pipeline_mode = #tpu.pipeline_mode<synchronous>, transform_indices = @transform_2, window_bounds = array<i64: 1, 32>}, {pipeline_mode = #tpu.pipeline_mode<synchronous>, transform_indices = @transform_3, window_bounds = array<i64: 32, 32>}, {pipeline_mode = #tpu.pipeline_mode<synchronous>, transform_indices = @transform_4, window_bounds = array<i64: 1, 32>}, {pipeline_mode = #tpu.pipeline_mode<synchronous>, transform_indices = @transform_5, window_bounds = array<i64: 32, 128>}, {pipeline_mode = #tpu.pipeline_mode<synchronous>, transform_indices = @transform_6, window_bounds = array<i64: 1, 128>}, {transform_indices = @transform_7, window_bounds = array<i64: 16, 128>}]} {
    %c0 = arith.constant 0 : index
    %c0_0 = arith.constant 0 : index
    %0 = vector.load %arg1[%c0, %c0_0] : memref<16x16xf32, #tpu.memory_space<vmem>>, vector<16x16xf32>
    %c0_1 = arith.constant 0 : index
    %c0_2 = arith.constant 0 : index
    %1 = vector.load %arg2[%c0_1, %c0_2] : memref<16x32xf32, #tpu.memory_space<vmem>>, vector<16x32xf32>
    %cst = arith.constant dense<0.000000e+00> : vector<16x32xf32>
    %2 = tpu.matmul %0, %1, %cst {dimension_numbers = #tpu.dot_dimension_numbers<[1], [0], [0], [1], [0, 0, 1, 1], [], []>} : vector<16x16xf32>, vector<16x32xf32>, vector<16x32xf32> -> vector<16x32xf32>
    %c0_3 = arith.constant 0 : index
    %c0_4 = arith.constant 0 : index
    %3 = vector.load %arg3[%c0_3, %c0_4] : memref<1x32xf32, #tpu.memory_space<vmem>>, vector<1x32xf32>
    %4 = vector.broadcast %3 : vector<1x32xf32> to vector<16x32xf32>
    %5 = arith.addf %2, %4 : vector<16x32xf32>
    %cst_5 = arith.constant 0.000000e+00 : f32
    %6 = vector.broadcast %cst_5 : f32 to vector<16x32xf32>
    %7 = arith.maximumf %5, %6 : vector<16x32xf32>
    %c0_6 = arith.constant 0 : index
    %c0_7 = arith.constant 0 : index
    %8 = vector.load %arg4[%c0_6, %c0_7] : memref<32x32xf32, #tpu.memory_space<vmem>>, vector<32x32xf32>
    %cst_8 = arith.constant dense<0.000000e+00> : vector<16x32xf32>
    %9 = tpu.matmul %7, %8, %cst_8 {dimension_numbers = #tpu.dot_dimension_numbers<[1], [0], [0], [1], [0, 0, 1, 1], [], []>} : vector<16x32xf32>, vector<32x32xf32>, vector<16x32xf32> -> vector<16x32xf32>
    %c0_9 = arith.constant 0 : index
    %c0_10 = arith.constant 0 : index
    %10 = vector.load %arg5[%c0_9, %c0_10] : memref<1x32xf32, #tpu.memory_space<vmem>>, vector<1x32xf32>
    %11 = vector.broadcast %10 : vector<1x32xf32> to vector<16x32xf32>
    %12 = arith.addf %9, %11 : vector<16x32xf32>
    %cst_11 = arith.constant 0.000000e+00 : f32
    %13 = vector.broadcast %cst_11 : f32 to vector<16x32xf32>
    %14 = arith.maximumf %12, %13 : vector<16x32xf32>
    %c0_12 = arith.constant 0 : index
    %c0_13 = arith.constant 0 : index
    %15 = vector.load %arg6[%c0_12, %c0_13] : memref<32x128xf32, #tpu.memory_space<vmem>>, vector<32x128xf32>
    %cst_14 = arith.constant dense<0.000000e+00> : vector<16x128xf32>
    %16 = tpu.matmul %14, %15, %cst_14 {dimension_numbers = #tpu.dot_dimension_numbers<[1], [0], [0], [1], [0, 0, 1, 1], [], []>} : vector<16x32xf32>, vector<32x128xf32>, vector<16x128xf32> -> vector<16x128xf32>
    %c0_15 = arith.constant 0 : index
    %c0_16 = arith.constant 0 : index
    %17 = vector.load %arg7[%c0_15, %c0_16] : memref<1x128xf32, #tpu.memory_space<vmem>>, vector<1x128xf32>
    %18 = vector.broadcast %17 : vector<1x128xf32> to vector<16x128xf32>
    %19 = arith.addf %16, %18 : vector<16x128xf32>
    %c0_17 = arith.constant 0 : index
    %c0_18 = arith.constant 0 : index
    %20 = vector.load %arg8[%c0_17, %c0_18] : memref<16x128xf32, #tpu.memory_space<vmem>>, vector<16x128xf32>
    tpu.vector_store %arg8[%c0_17, %c0_18], %19 {strides = array<i32>} : memref<16x128xf32, #tpu.memory_space<vmem>>, vector<16x128xf32>,
    return
  }
  func.func @transform_0(%arg0: i32) -> (i32, i32) {
    %c0_i32 = arith.constant 0 : i32
    %c0_i32_0 = arith.constant 0 : i32
    return %arg0, %c0_i32 : i32, i32
  }
  func.func @transform_1(%arg0: i32) -> (i32, i32) {
    %c0_i32 = arith.constant 0 : i32
    %c0_i32_0 = arith.constant 0 : i32
    %c0_i32_1 = arith.constant 0 : i32
    return %c0_i32, %c0_i32_0 : i32, i32
  }
  func.func @transform_2(%arg0: i32) -> (i32, i32) {
    %c0_i32 = arith.constant 0 : i32
    %c0_i32_0 = arith.constant 0 : i32
    %c0_i32_1 = arith.constant 0 : i32
    return %c0_i32, %c0_i32_0 : i32, i32
  }
  func.func @transform_3(%arg0: i32) -> (i32, i32) {
    %c0_i32 = arith.constant 0 : i32
    %c0_i32_0 = arith.constant 0 : i32
    %c0_i32_1 = arith.constant 0 : i32
    return %c0_i32, %c0_i32_0 : i32, i32
  }
  func.func @transform_4(%arg0: i32) -> (i32, i32) {
    %c0_i32 = arith.constant 0 : i32
    %c0_i32_0 = arith.constant 0 : i32
    %c0_i32_1 = arith.constant 0 : i32
    return %c0_i32, %c0_i32_0 : i32, i32
  }
  func.func @transform_5(%arg0: i32) -> (i32, i32) {
    %c0_i32 = arith.constant 0 : i32
    %c0_i32_0 = arith.constant 0 : i32
    %c0_i32_1 = arith.constant 0 : i32
    return %c0_i32, %c0_i32_0 : i32, i32
  }
  func.func @transform_6(%arg0: i32) -> (i32, i32) {
    %c0_i32 = arith.constant 0 : i32
    %c0_i32_0 = arith.constant 0 : i32
    %c0_i32_1 = arith.constant 0 : i32
    return %c0_i32, %c0_i32_0 : i32, i32
  }
  func.func @transform_7(%arg0: i32) -> (i32, i32) {
    %c0_i32 = arith.constant 0 : i32
    %c0_i32_0 = arith.constant 0 : i32
    return %arg0, %c0_i32 : i32, i32
  }
}

</mosaic_0001>

<llo_original>
// kernel: particle_predictor_forward.1
$region0: #{particle_predictor_forward.1}
  #allocation0 [shape = 'u32[]', space=smem, size = 0x4, offset = 0x4, fixed_abs, tag = 'smem constant byte address 0x4 - core index']
  #allocation1 [shape = 'u32[72,128]{1,0:T(1,128)}', space=vmem, size = 0x9000, scoped, tag = 'internal scratch']
  %s0 = inlined_call_operand.vmem [shape: f32[16,16], index: 0, kind: input, shape index: {}]
  %s1 = inlined_call_operand.vmem [shape: f32[16,32], index: 1, kind: input, shape index: {}]
  %s2 = inlined_call_operand.vmem [shape: f32[1,32], index: 2, kind: input, shape index: {}]
  %s3 = inlined_call_operand.vmem [shape: f32[32,32], index: 3, kind: input, shape index: {}]
  %s4 = inlined_call_operand.vmem [shape: f32[1,32], index: 4, kind: input, shape index: {}]
  %s5 = inlined_call_operand.vmem [shape: f32[32,128], index: 5, kind: input, shape index: {}]
  %s6 = inlined_call_operand.vmem [shape: f32[1,128], index: 6, kind: input, shape index: {}]
  %s7 = inlined_call_operand.vmem [shape: f32[16,128], index: 7, kind: output, shape index: {}]
  %s8 = sld [smem:[#allocation0]]
  $region38: #{particle_predictor_forward.1} parent=0
    _
  %s10 = ssub.s32 1, %s8
  %s11 = scalar_select 0, %s10, %s8
  // Predicated region
  $region2: #{particle_predictor_forward.1} parent=0 // pred_check
    _
  $region3: #{particle_predictor_forward.1} parent=0 // pred_check_branch
    %13 = sbr.rel (0) target = $region5
  $region4: #{particle_predictor_forward.1} parent=0 // pred_region
    _
  $region5: #{particle_predictor_forward.1} parent=0 // pred_fallthru
    _
  // Predicated region
  $region6: #{particle_predictor_forward.1} parent=0 // pred_check
    _
  $region7: #{particle_predictor_forward.1} parent=0 // pred_check_branch
    %15 = sbr.rel (0) target = $region9
  $region8: #{particle_predictor_forward.1} parent=0 // pred_region
    _
  $region9: #{particle_predictor_forward.1} parent=0 // pred_fallthru
    _
  // Predicated region
  $region10: #{particle_predictor_forward.1} parent=0 // pred_check
    _
  $region11: #{particle_predictor_forward.1} parent=0 // pred_check_branch
    %17 = sbr.rel (0) target = $region13
  $region12: #{particle_predictor_forward.1} parent=0 // pred_region
    _
  $region13: #{particle_predictor_forward.1} parent=0 // pred_fallthru
    _
  // Predicated region
  $region14: #{particle_predictor_forward.1} parent=0 // pred_check
    _
  $region15: #{particle_predictor_forward.1} parent=0 // pred_check_branch
    %19 = sbr.rel (0) target = $region17
  $region16: #{particle_predictor_forward.1} parent=0 // pred_region
    _
  $region17: #{particle_predictor_forward.1} parent=0 // pred_fallthru
    _
  // Predicated region
  $region18: #{particle_predictor_forward.1} parent=0 // pred_check
    _
  $region19: #{particle_predictor_forward.1} parent=0 // pred_check_branch
    %21 = sbr.rel (0) target = $region21
  $region20: #{particle_predictor_forward.1} parent=0 // pred_region
    _
  $region21: #{particle_predictor_forward.1} parent=0 // pred_fallthru
    _
  // Predicated region
  $region22: #{particle_predictor_forward.1} parent=0 // pred_check
    _
  $region23: #{particle_predictor_forward.1} parent=0 // pred_check_branch
    %23 = sbr.rel (0) target = $region25
  $region24: #{particle_predictor_forward.1} parent=0 // pred_region
    _
  $region25: #{particle_predictor_forward.1} parent=0 // pred_fallthru
    _
  // Predicated region
  $region26: #{particle_predictor_forward.1} parent=0 // pred_check
    _
  $region27: #{particle_predictor_forward.1} parent=0 // pred_check_branch
    %25 = sbr.rel (0) target = $region29
  $region28: #{particle_predictor_forward.1} parent=0 // pred_region
    _
  $region29: #{particle_predictor_forward.1} parent=0 // pred_fallthru
    _
  %v26 = vld [vmem:[%s0] sm:$0xff]
  %v27 = vld [vmem:[%s0 + $0x8] sm:$0xff]
  %v28 = vld [vmem:[%s1] sm:$0xff]
  %v29 = vld [vmem:[%s1 + $0x8] sm:$0xff]
  %v30 = vld [vmem:[%s2] sm:$0x1]
  %v32 = vperm.slane %v30, 0
  %vm34 = vcmask 130048
  %v36 = vsel %vm34, %v26, 0
  %v39 = vsel %vm34, %v27, 0
  %41 = vmatpush.msra.mxu0 0.0
  %42 = vmatpush.msra.mxu0 0.0
  %43 = vmatpush.msra.mxu0 0.0
  %44 = vmatpush.msra.mxu0 0.0
  %45 = vmatpush.msra.mxu0 0.0
  %46 = vmatpush.msra.mxu0 0.0
  %47 = vmatpush.msra.mxu0 0.0
  %48 = vmatpush.msra.mxu0 0.0
  %49 = vmatpush.msra.mxu0 0.0
  %50 = vmatpush.msra.mxu0 0.0
  %51 = vmatpush.msra.mxu0 0.0
  %52 = vmatpush.msra.mxu0 0.0
  %53 = vmatpush.msra.mxu0 0.0
  %54 = vmatpush.msra.mxu0 0.0
  %55 = vmatpush.msra.mxu0 %v29
  %56 = vmatpush.msra.mxu0 %v28
  %57 = vmatmul.f32.gmra.mxu0 %v36
  %v58 = vpop.f32.mrf.mxu0
  %v59 = vadd.f32 %v32, %v58
  %60 = vmatmul.f32.gmra.mxu0 %v39
  %v61 = vpop.f32.mrf.mxu0
  %v62 = vadd.f32 %v32, %v61
  %63 = vdwg.mxu0
  %v64 = vmax.f32 %v59, 0.0
  %v65 = vmax.f32 %v62, 0.0
  %v66 = vld [vmem:[%s3] sm:$0xff]
  %v67 = vld [vmem:[%s3 + $0x8] sm:$0xff]
  %v68 = vld [vmem:[%s3 + $0x10] sm:$0xff]
  %v69 = vld [vmem:[%s3 + $0x18] sm:$0xff]
  %v70 = vld [vmem:[%s4] sm:$0x1]
  %v72 = vperm.slane %v70, 0
  %vm74 = vcmask 261120
  %v76 = vsel %vm74, %v64, 0
  %v79 = vsel %vm74, %v65, 0
  %81 = vmatpush.msra.mxu0 0.0
  %82 = vmatpush.msra.mxu0 0.0
  %83 = vmatpush.msra.mxu0 0.0
  %84 = vmatpush.msra.mxu0 0.0
  %85 = vmatpush.msra.mxu0 0.0
  %86 = vmatpush.msra.mxu0 0.0
  %87 = vmatpush.msra.mxu0 0.0
  %88 = vmatpush.msra.mxu0 0.0
  %89 = vmatpush.msra.mxu0 0.0
  %90 = vmatpush.msra.mxu0 0.0
  %91 = vmatpush.msra.mxu0 0.0
  %92 = vmatpush.msra.mxu0 0.0
  %93 = vmatpush.msra.mxu0 %v69
  %94 = vmatpush.msra.mxu0 %v68
  %95 = vmatpush.msra.mxu0 %v67
  %96 = vmatpush.msra.mxu0 %v66
  %97 = vmatmul.f32.gmra.mxu0 %v76
  %v98 = vpop.f32.mrf.mxu0
  %v99 = vadd.f32 %v72, %v98
  %100 = vmatmul.f32.gmra.mxu0 %v79
  %v101 = vpop.f32.mrf.mxu0
  %v102 = vadd.f32 %v72, %v101
  %103 = vdwg.mxu0
  %v104 = vmax.f32 %v99, 0.0
  %v105 = vmax.f32 %v102, 0.0
  %v106 = vld [vmem:[%s5] sm:$0xff]
  %v107 = vld [vmem:[%s5 + $0x8] sm:$0xff]
  %v108 = vld [vmem:[%s5 + $0x10] sm:$0xff]
  %v109 = vld [vmem:[%s5 + $0x18] sm:$0xff]
  %v110 = vld [vmem:[%s6] sm:$0x1]
  %v112 = vperm.slane %v110, 0
  %v115 = vsel %vm74, %v104, 0
  %v118 = vsel %vm74, %v105, 0
  %120 = vmatpush.msra.mxu0 0.0
  %121 = vmatpush.msra.mxu0 0.0
  %122 = vmatpush.msra.mxu0 0.0
  %123 = vmatpush.msra.mxu0 0.0
  %124 = vmatpush.msra.mxu0 0.0
  %125 = vmatpush.msra.mxu0 0.0
  %126 = vmatpush.msra.mxu0 0.0
  %127 = vmatpush.msra.mxu0 0.0
  %128 = vmatpush.msra.mxu0 0.0
  %129 = vmatpush.msra.mxu0 0.0
  %130 = vmatpush.msra.mxu0 0.0
  %131 = vmatpush.msra.mxu0 0.0
  %132 = vmatpush.msra.mxu0 %v109
  %133 = vmatpush.msra.mxu0 %v108
  %134 = vmatpush.msra.mxu0 %v107
  %135 = vmatpush.msra.mxu0 %v106
  %136 = vmatmul.f32.gmra.mxu0 %v115
  %v137 = vpop.f32.mrf.mxu0
  %v138 = vadd.f32 %v112, %v137
  %139 = vmatmul.f32.gmra.mxu0 %v118
  %v140 = vpop.f32.mrf.mxu0
  %v141 = vadd.f32 %v112, %v140
  %142 = vdwg.mxu0
  %143 = vst [vmem:[%s7] sm:$0xff] %v138
  %144 = vst [vmem:[%s7 + $0x8] sm:$0xff] %v141
  // Predicated region
  $region30: #{particle_predictor_forward.1} parent=0 // pred_check
    _
  $region31: #{particle_predictor_forward.1} parent=0 // pred_check_branch
    %146 = sbr.rel (0) target = $region33
  $region32: #{particle_predictor_forward.1} parent=0 // pred_region
    _
  $region33: #{particle_predictor_forward.1} parent=0 // pred_fallthru
    _
  // Predicated region
  $region34: #{particle_predictor_forward.1} parent=0 // pred_check
    _
  $region35: #{particle_predictor_forward.1} parent=0 // pred_check_branch
    %148 = sbr.rel (0) target = $region37
  $region36: #{particle_predictor_forward.1} parent=0 // pred_region
    _
  $region37: #{particle_predictor_forward.1} parent=0 // pred_fallthru
    _

</llo_original>
